<compile_context>
chip_gen: v7x
topology: tpu7x:2x2x1
jax: 0.10.0
libtpu: 0.0.40
codegen_flags: <defaults>
</compile_context>

<pallas_src>
import jax
import jax.numpy as jnp
from jax.experimental import pallas as pl
from jax.experimental.pallas import tpu as pltpu

_LANES = 128


def _vmem_budgets():
    """(tile_budget_bytes, vmem_limit_bytes), sized per TPU generation."""
    cap = 64 * 1024 * 1024  # conservative fallback (v7x-sized)
    try:
        cap = int(pltpu.get_tpu_info().vmem_capacity_bytes)
    except Exception:
        pass
    if cap >= 128 * 1024 * 1024:          # v5e / v6e: 128 MiB VMEM
        return 64 * 1024 * 1024, 100 * 1024 * 1024
    return 24 * 1024 * 1024, 48 * 1024 * 1024   # v7x: 64 MiB VMEM


def _pick_tb(batch, n_classes, x_bytes, t_bytes, tb_max, tile_budget):
    # Double-buffered input blocks (2 inputs x 2 buffers) + ~4 live f32
    # temporaries per element.
    per_row = n_classes * (2 * x_bytes + 2 * t_bytes + 4 * 4)
    # Native sublane multiple: 8 for f32, 16 for bf16, 32 for int8.
    sub = max(8, 32 // max(1, x_bytes), 32 // max(1, t_bytes))
    cap = max(sub, (int(tile_budget // per_row) // sub) * sub)
    tb = min(batch, tb_max, cap)
    if tb < batch:
        tb = max(sub, (tb // sub) * sub)
    return int(tb)


def _make_loss_kernel(batch, tb):
    ragged = (batch % tb) != 0

    def loss_kernel(w_ref, x_ref, t_ref, o_ref):
        # w_ref: (2,) f32 in SMEM; x_ref/t_ref: (tb, C) VMEM tiles;
        # o_ref: (1, 128) lane-dense partial sum.
        w0 = w_ref[0]
        w1 = w_ref[1]
        x = x_ref[...].astype(jnp.float32)   # (+1e-8 dropped: softmax shift-invariant)
        t = t_ref[...].astype(jnp.float32)

        if ragged:
            # Tail rows of the last tile hold undefined data: sanitize BEFORE exp.
            row_ids = (pl.program_id(0) * tb
                       + jax.lax.broadcasted_iota(jnp.int32, (tb, 1), 0))
            valid = row_ids < batch
            x = jnp.where(valid, x, 0.0)

        # Numerically stable softmax pieces over the class (lane) axis.
        m = jnp.max(x, axis=-1, keepdims=True)            # (tb, 1)
        xm = x - m
        e = jnp.exp(xm)                                   # EUP
        denom = jnp.sum(e, axis=-1, keepdims=True)        # (tb, 1), XLU reduce
        log_denom = jnp.log(denom)                        # per-row
        eps_denom = 1e-8 * denom                          # per-row

        # Exact:  log(p + 1e-8)      (no per-element division / explicit p)
        log_p_eps = jnp.log(e + eps_denom) - log_denom
        # Exact:  log(1 - p + 1e-8)  (denom - e >= 0 always -> argument > 0)
        log_1mp_eps = jnp.log(denom + eps_denom - e) - log_denom

        term = log_1mp_eps * (1.0 - t) * w0 + log_p_eps * t * w1
        row_loss = -jnp.sum(term, axis=-1, keepdims=True)  # (tb, 1)

        if ragged:
            row_loss = jnp.where(valid, row_loss, 0.0)

        tile_loss = jnp.sum(row_loss, axis=0, keepdims=True)   # (1, 1)
        o_ref[...] = jnp.broadcast_to(tile_loss, (1, _LANES))  # unmasked 128-lane store

    return loss_kernel


def softmax_ranking_loss(inputs, targets, weights, *, tb_max: int = 2048):
    """Pallas TPU implementation of SoftmaxRankingLoss.forward for 2-D (B, C)."""
    assert inputs.shape == targets.shape
    B, C = inputs.shape

    w = jnp.asarray(weights, dtype=jnp.float32).reshape(2)   # jit-safe (traced OK)

    tile_budget, vmem_limit = _vmem_budgets()
    tb = _pick_tb(B, C, inputs.dtype.itemsize, targets.dtype.itemsize,
                  tb_max, tile_budget)
    num_tiles = pl.cdiv(B, tb)

    partial = pl.pallas_call(
        _make_loss_kernel(B, tb),
        out_shape=jax.ShapeDtypeStruct((1, num_tiles * _LANES), jnp.float32),
        grid_spec=pltpu.PrefetchScalarGridSpec(
            num_scalar_prefetch=0,
            grid=(num_tiles,),
            in_specs=[
                pl.BlockSpec(memory_space=pltpu.MemorySpace.SMEM),   # weights (2,)
                pl.BlockSpec((tb, C), lambda i: (i, 0)),
                pl.BlockSpec((tb, C), lambda i: (i, 0)),
            ],
            out_specs=pl.BlockSpec((1, _LANES), lambda i: (0, i)),
        ),
        compiler_params=pltpu.CompilerParams(
            dimension_semantics=("parallel",),
            vmem_limit_bytes=vmem_limit,
        ),
    )(w, inputs, targets)

    # Every lane of each (1,128) block holds the same tile partial sum.
    return jnp.sum(partial) / (float(_LANES) * B)


def _reference(inputs, targets, weights):
    x = inputs.astype(jnp.float32) + 1e-8
    p = jax.nn.softmax(x, axis=1)
    t = targets.astype(jnp.float32)
    w = jnp.asarray(weights, dtype=jnp.float32)
    term = (jnp.log(1.0 - p + 1e-8) * (1.0 - t) * w[0]
            + jnp.log(p + 1e-8) * t * w[1])
    return jnp.mean(-jnp.sum(term, axis=1))


if __name__ == "__main__":
    weights = jnp.array([0.3, 0.7], dtype=jnp.float32)
    key = jax.random.PRNGKey(0)

    def make_case(k, B, C, dtype):
        k_in, k_tg = jax.random.split(k)
        inputs = jax.random.normal(k_in, (B, C), dtype=jnp.float32).astype(dtype)
        labels = jax.random.randint(k_tg, (B,), 0, C)
        targets = jax.nn.one_hot(labels, C, dtype=dtype)
        return inputs, targets

    cases = [
        # (B,   C,   dtype,         tb_max)
        (16,  128, jnp.float32,  2048),   # small baseline, single tile
        (16,  128, jnp.bfloat16, 2048),   # narrow-dtype inputs (halved HBM stream)
        (300, 256, jnp.float32,   256),   # ragged batch: cdiv grid + tail-row mask
    ]
    keys = jax.random.split(key, len(cases))
    for idx, (k, (B, C, dtype, tb_max)) in enumerate(zip(keys, cases)):
        inputs, targets = make_case(k, B, C, dtype)
        loss = softmax_ranking_loss(inputs, targets, weights, tb_max=tb_max)
        loss = jax.block_until_ready(loss)
        ref = _reference(inputs, targets, weights)
        assert jnp.allclose(loss, ref, rtol=1e-4, atol=1e-4), (B, C, dtype, loss, ref)
        if idx == 0:
            # Jit path with traced weights (no float() baking -> no per-weight recompile).
            jloss = jax.block_until_ready(
                jax.jit(softmax_ranking_loss)(inputs, targets, weights))
            assert jnp.allclose(jloss, ref, rtol=1e-4, atol=1e-4), (jloss, ref)

    print("KERNEL_OK")
</pallas_src>

<mosaic_0001>
module attributes {stable_mosaic.version = 11 : i64} {
  func.func @loss_kernel(%arg0: i32, %arg1: memref<2xf32, #tpu.memory_space<smem>>, %arg2: memref<16x128xf32, #tpu.memory_space<vmem>>, %arg3: memref<16x128xf32, #tpu.memory_space<vmem>>, %arg4: memref<1x128xf32, #tpu.memory_space<vmem>>) attributes {dimension_semantics = [#tpu.dimension_semantics<parallel>], iteration_bounds = array<i64: 1>, scalar_prefetch = 0 : i64, scratch_operands = 0 : i64, tpu.core_type = #tpu.core_type<tc>, window_params = [{transform_indices = @transform_0, window_bounds = array<i64: 2>}, {transform_indices = @transform_1, window_bounds = array<i64: 16, 128>}, {transform_indices = @transform_2, window_bounds = array<i64: 16, 128>}, {transform_indices = @transform_3, window_bounds = array<i64: 1, 128>}]} {
    %c0 = arith.constant 0 : index
    %0 = memref.load %arg1[%c0] : memref<2xf32, #tpu.memory_space<smem>>
    %c1 = arith.constant 1 : index
    %1 = memref.load %arg1[%c1] : memref<2xf32, #tpu.memory_space<smem>>
    %c0_0 = arith.constant 0 : index
    %c0_1 = arith.constant 0 : index
    %2 = vector.load %arg2[%c0_0, %c0_1] : memref<16x128xf32, #tpu.memory_space<vmem>>, vector<16x128xf32>
    %c0_2 = arith.constant 0 : index
    %c0_3 = arith.constant 0 : index
    %3 = vector.load %arg3[%c0_2, %c0_3] : memref<16x128xf32, #tpu.memory_space<vmem>>, vector<16x128xf32>
    %cst = arith.constant dense<0xFF800000> : vector<16xf32>
    %4 = vector.multi_reduction <maximumf>, %2, %cst [1] : vector<16x128xf32> to vector<16xf32>
    %5 = vector.shape_cast %4 : vector<16xf32> to vector<16x1xf32>
    %6 = vector.broadcast %5 : vector<16x1xf32> to vector<16x128xf32>
    %7 = arith.subf %2, %6 : vector<16x128xf32>
    %8 = math.exp %7 : vector<16x128xf32>
    %cst_4 = arith.constant dense<0.000000e+00> : vector<16xf32>
    %9 = vector.multi_reduction <add>, %8, %cst_4 [1] : vector<16x128xf32> to vector<16xf32>
    %10 = vector.shape_cast %9 : vector<16xf32> to vector<16x1xf32>
    %11 = math.log %10 : vector<16x1xf32>
    %cst_5 = arith.constant 9.99999993E-9 : f32
    %12 = vector.broadcast %cst_5 : f32 to vector<16x1xf32>
    %13 = arith.mulf %12, %10 : vector<16x1xf32>
    %14 = vector.broadcast %13 : vector<16x1xf32> to vector<16x128xf32>
    %15 = arith.addf %8, %14 : vector<16x128xf32>
    %16 = math.log %15 : vector<16x128xf32>
    %17 = vector.broadcast %11 : vector<16x1xf32> to vector<16x128xf32>
    %18 = arith.subf %16, %17 : vector<16x128xf32>
    %19 = arith.addf %10, %13 : vector<16x1xf32>
    %20 = vector.broadcast %19 : vector<16x1xf32> to vector<16x128xf32>
    %21 = arith.subf %20, %8 : vector<16x128xf32>
    %22 = math.log %21 : vector<16x128xf32>
    %23 = vector.broadcast %11 : vector<16x1xf32> to vector<16x128xf32>
    %24 = arith.subf %22, %23 : vector<16x128xf32>
    %cst_6 = arith.constant 1.000000e+00 : f32
    %25 = vector.broadcast %cst_6 : f32 to vector<16x128xf32>
    %26 = arith.subf %25, %3 : vector<16x128xf32>
    %27 = arith.mulf %24, %26 : vector<16x128xf32>
    %28 = vector.broadcast %0 : f32 to vector<16x128xf32>
    %29 = arith.mulf %27, %28 : vector<16x128xf32>
    %30 = arith.mulf %18, %3 : vector<16x128xf32>
    %31 = vector.broadcast %1 : f32 to vector<16x128xf32>
    %32 = arith.mulf %30, %31 : vector<16x128xf32>
    %33 = arith.addf %29, %32 : vector<16x128xf32>
    %cst_7 = arith.constant dense<0.000000e+00> : vector<16xf32>
    %34 = vector.multi_reduction <add>, %33, %cst_7 [1] : vector<16x128xf32> to vector<16xf32>
    %35 = vector.shape_cast %34 : vector<16xf32> to vector<16x1xf32>
    %cst_8 = arith.constant 0.000000e+00 : f32
    %36 = vector.broadcast %cst_8 : f32 to vector<16x1xf32>
    %37 = arith.subf %36, %35 : vector<16x1xf32>
    %cst_9 = arith.constant dense<0.000000e+00> : vector<1xf32>
    %38 = vector.multi_reduction <add>, %37, %cst_9 [0] : vector<16x1xf32> to vector<1xf32>
    %39 = vector.shape_cast %38 : vector<1xf32> to vector<1x1xf32>
    %40 = vector.shape_cast %39 : vector<1x1xf32> to vector<1x1xf32>
    %41 = vector.broadcast %40 : vector<1x1xf32> to vector<1x128xf32>
    %c0_10 = arith.constant 0 : index
    %c0_11 = arith.constant 0 : index
    %42 = vector.load %arg4[%c0_10, %c0_11] : memref<1x128xf32, #tpu.memory_space<vmem>>, vector<1x128xf32>
    tpu.vector_store %arg4[%c0_10, %c0_11], %41 {strides = array<i32>} : memref<1x128xf32, #tpu.memory_space<vmem>>, vector<1x128xf32>,
    return
  }
  func.func @transform_0(%arg0: i32) -> i32 {
    %c0_i32 = arith.constant 0 : i32
    %c0_i32_0 = arith.constant 0 : i32
    return %c0_i32 : i32
  }
  func.func @transform_1(%arg0: i32) -> (i32, i32) {
    %c0_i32 = arith.constant 0 : i32
    %c0_i32_0 = arith.constant 0 : i32
    return %arg0, %c0_i32 : i32, i32
  }
  func.func @transform_2(%arg0: i32) -> (i32, i32) {
    %c0_i32 = arith.constant 0 : i32
    %c0_i32_0 = arith.constant 0 : i32
    return %arg0, %c0_i32 : i32, i32
  }
  func.func @transform_3(%arg0: i32) -> (i32, i32) {
    %c0_i32 = arith.constant 0 : i32
    %c0_i32_0 = arith.constant 0 : i32
    return %c0_i32, %arg0 : i32, i32
  }
}

</mosaic_0001>

<llo_original>
// kernel: tpu_custom_call.1
$region0: #{tpu_custom_call.1}
  #allocation0 [shape = 'u32[]', space=smem, size = 0x4, offset = 0x4, fixed_abs, tag = 'smem constant byte address 0x4 - core index']
  #allocation1 [shape = 'u32[144,128]{1,0:T(1,128)}', space=vmem, size = 0x12000, scoped, tag = 'internal scratch']
  %s0 = inlined_call_operand.hbm [shape: f32[2], index: 0, kind: input, shape index: {}]
  %s1 = inlined_call_operand.hbm [shape: f32[16,128], index: 1, kind: input, shape index: {}]
  %s2 = inlined_call_operand.hbm [shape: f32[16,128], index: 2, kind: input, shape index: {}]
  %s3 = inlined_call_operand.hbm [shape: f32[1,128], index: 3, kind: output, shape index: {}]
  %s4 = sld [smem:[#allocation0]]
  $region34: #{tpu_custom_call.1} parent=0
    _
  %s6 = ssub.s32 1, %s4
  %s7 = scalar_select 0, %s6, %s4
  $region1: #{tpu_custom_call.1} parent=0
    #allocation2 [shape = 'u8[512]{0}', space=smem, size = 0x200, scoped, tag = 'input window, operand 0, single buffered']
    #allocation3 [shape = 's32[1]{0}', space=sflag, size = 0x4, scoped, tag = 'scoped memory for tpu_custom_call.1']
    #allocation4 [shape = 's32[1]{0}', space=sflag, size = 0x4, scoped, tag = 'scoped memory for tpu_custom_call.1']
    #allocation5 [shape = 's32[1]{0}', space=sflag, size = 0x4, scoped, tag = 'scoped memory for tpu_custom_call.1']
    #allocation6 [shape = 'u8[8192]{0}', space=vmem, size = 0x2000, scoped, tag = 'input window, operand 1, single buffered']
    #allocation7 [shape = 'u8[8192]{0}', space=vmem, size = 0x2000, scoped, tag = 'input window, operand 2, single buffered']
    #allocation8 [shape = 's32[1]{0}', space=sflag, size = 0x4, scoped, tag = 'scoped memory for tpu_custom_call.1']
    #allocation9 [shape = 'u8[512]{0}', space=vmem, size = 0x400, scoped, tag = 'output window, operand 0, single buffered']
    %8 = vsyncpa [#allocation5], 0
    %9 = vsyncpa [#allocation3], 0
    %10 = vsyncpa [#allocation8], 0
    %11 = vsyncpa [#allocation4], 0
    // Predicated region
    $region2: #{tpu_custom_call.1} parent=1 // pred_check
      _
    $region3: #{tpu_custom_call.1} parent=1 // pred_check_branch
      %13 = sbr.rel (0) target = $region5
    $region4: #{tpu_custom_call.1} parent=1 // pred_region
      %s15 = ssub.s32 16, 16
      %16 = vsyncadd [#allocation5], %s15
      %19 = dma.hbm_to_smem %s0, 16, [#allocation2], [#allocation5]
    $region5: #{tpu_custom_call.1} parent=1 // pred_fallthru
      _
    // Predicated region
    $region6: #{tpu_custom_call.1} parent=1 // pred_check
      _
    $region7: #{tpu_custom_call.1} parent=1 // pred_check_branch
      %21 = sbr.rel (0) target = $region9
    $region8: #{tpu_custom_call.1} parent=1 // pred_region
      %s23 = ssub.s32 256, 256
      %24 = vsyncadd [#allocation3], %s23
      %s25 = sshll.u32 [#allocation6], 4
      %s26 = int_to_ptr.vmem [resolvable:$true] %s25
      %31 = dma.hbm_to_vmem [thread:$0]  %s1, 256, %s26, [#allocation3], 128, 128, 8
    $region9: #{tpu_custom_call.1} parent=1 // pred_fallthru
      _
    // Predicated region
    $region10: #{tpu_custom_call.1} parent=1 // pred_check
      _
    $region11: #{tpu_custom_call.1} parent=1 // pred_check_branch
      %33 = sbr.rel (0) target = $region13
    $region12: #{tpu_custom_call.1} parent=1 // pred_region
      %s35 = ssub.s32 256, 256
      %36 = vsyncadd [#allocation8], %s35
      %s37 = sshll.u32 [#allocation7], 4
      %s38 = int_to_ptr.vmem [resolvable:$true] %s37
      %43 = dma.hbm_to_vmem [thread:$0]  %s2, 256, %s38, [#allocation8], 128, 128, 8
    $region13: #{tpu_custom_call.1} parent=1 // pred_fallthru
      _
    // Predicated region
    $region14: #{tpu_custom_call.1} parent=1 // pred_check
      _
    $region15: #{tpu_custom_call.1} parent=1 // pred_check_branch
      %45 = sbr.rel (0) target = $region17
    $region16: #{tpu_custom_call.1} parent=1 // pred_region
      %46 = dma.done [#allocation5], 16
    $region17: #{tpu_custom_call.1} parent=1 // pred_fallthru
      _
    // Predicated region
    $region18: #{tpu_custom_call.1} parent=1 // pred_check
      _
    $region19: #{tpu_custom_call.1} parent=1 // pred_check_branch
      %48 = sbr.rel (0) target = $region21
    $region20: #{tpu_custom_call.1} parent=1 // pred_region
      %49 = dma.done [#allocation3], 256
    $region21: #{tpu_custom_call.1} parent=1 // pred_fallthru
      _
    // Predicated region
    $region22: #{tpu_custom_call.1} parent=1 // pred_check
      _
    $region23: #{tpu_custom_call.1} parent=1 // pred_check_branch
      %51 = sbr.rel (0) target = $region25
    $region24: #{tpu_custom_call.1} parent=1 // pred_region
      %52 = dma.done [#allocation8], 256
    $region25: #{tpu_custom_call.1} parent=1 // pred_fallthru
      _
    %53 = sfence
    %s54 = sld [smem:[#allocation2]]
    %s55 = sld [smem:[#allocation2 + $0x1]]
    %v56 = vld [vmem:[#allocation6] sm:$0xff]
    %v57 = vld [vmem:[#allocation6 + $0x8] sm:$0xff]
    %v58 = vld [vmem:[#allocation7] sm:$0xff]
    %v59 = vld [vmem:[#allocation7 + $0x8] sm:$0xff]
    %60 = vmax.xlane.f32.xlu0 %v56
    %v61 = vpop.xlane.xlu0 %60
    %62 = vmax.xlane.f32.xlu0 %v57
    %v63 = vpop.xlane.xlu0 %62
    %v64 = vsub.f32 %v56, %v61
    %v65 = vsub.f32 %v57, %v63
    %v66 = vmul.f32 %v64, 1.442695
    %v67 = vpow.pop %v66
    %v68 = vmul.f32 %v65, 1.442695
    %v69 = vpow.pop %v68
    %70 = vadd.xlane.f32.xlu0 %v67
    %v71 = vpop.xlane.xlu0 %70
    %72 = vadd.xlane.f32.xlu0 %v69
    %v73 = vpop.xlane.xlu0 %72
    %v74 = vlog2.pop %v71
    %v75 = vmul.f32 %v74, 0.6931472
    %v76 = vlog2.pop %v73
    %v77 = vmul.f32 %v76, 0.6931472
    %v78 = vmul.f32 %v71, 1e-08
    %v79 = vmul.f32 %v73, 1e-08
    %v80 = vadd.f32 %v67, %v78
    %v81 = vadd.f32 %v69, %v79
    %v82 = vlog2.pop %v80
    %v83 = vmul.f32 %v82, 0.6931472
    %v84 = vlog2.pop %v81
    %v85 = vmul.f32 %v84, 0.6931472
    %v86 = vsub.f32 %v83, %v75
    %v87 = vsub.f32 %v85, %v77
    %v88 = vadd.f32 %v71, %v78
    %v89 = vadd.f32 %v73, %v79
    %v90 = vsub.f32 %v88, %v67
    %v91 = vsub.f32 %v89, %v69
    %v92 = vlog2.pop %v90
    %v93 = vmul.f32 %v92, 0.6931472
    %v94 = vlog2.pop %v91
    %v95 = vmul.f32 %v94, 0.6931472
    %v96 = vsub.f32 %v93, %v75
    %v97 = vsub.f32 %v95, %v77
    %v98 = vsub.f32 1.0, %v58
    %v99 = vsub.f32 1.0, %v59
    %v100 = vmul.f32 %v96, %v98
    %v101 = vmul.f32 %v97, %v99
    %v102 = vstv %s54
    %v103 = vmul.f32 %v100, %v102
    %v104 = vmul.f32 %v101, %v102
    %v105 = vmul.f32 %v86, %v58
    %v106 = vmul.f32 %v87, %v59
    %v107 = vstv %s55
    %v108 = vmul.f32 %v105, %v107
    %v109 = vmul.f32 %v106, %v107
    %v110 = vadd.f32 %v103, %v108
    %v111 = vadd.f32 %v104, %v109
    %112 = vadd.xlane.f32.xlu0 %v110
    %v113 = vpop.xlane.xlu0 %112
    %114 = vadd.xlane.f32.xlu0 %v111
    %v115 = vpop.xlane.xlu0 %114
    %v116 = vsub.f32 0.0, %v113
    %v117 = vsub.f32 0.0, %v115
    %v118 = vadd.f32 %v116, %v117
    %v119 = vrot.slane %v118, 4
    %v120 = vadd.f32 %v118, %v119
    %v121 = vrot.slane %v120, 2
    %v122 = vadd.f32 %v120, %v121
    %v123 = vrot.slane %v122, 1
    %v124 = vadd.f32 %v122, %v123
    %125 = vst [vmem:[#allocation9] sm:$0x1] %v124
    // Predicated region
    $region26: #{tpu_custom_call.1} parent=1 // pred_check
      _
    $region27: #{tpu_custom_call.1} parent=1 // pred_check_branch
      %127 = sbr.rel (0) target = $region29
    $region28: #{tpu_custom_call.1} parent=1 // pred_region
      %s129 = ssub.s32 16, 16
      %130 = vsyncadd [#allocation4], %s129
      %s132 = sshll.u32 [#allocation9], 4
      %s133 = int_to_ptr.vmem [resolvable:$true] %s132
      %135 = dma.vmem_to_hbm [thread:$0]  %s133, 16, %s3, [#allocation4]
    $region29: #{tpu_custom_call.1} parent=1 // pred_fallthru
      _
    // Predicated region
    $region30: #{tpu_custom_call.1} parent=1 // pred_check
      _
    $region31: #{tpu_custom_call.1} parent=1 // pred_check_branch
      %137 = sbr.rel (0) target = $region33
    $region32: #{tpu_custom_call.1} parent=1 // pred_region
      %138 = dma.done [#allocation4], 16
    $region33: #{tpu_custom_call.1} parent=1 // pred_fallthru
      _
    %139 = vsyncpa [#allocation3], 1
    %140 = vsyncpa [#allocation8], 1
    %141 = vsyncpa [#allocation4], 1
    %142 = vsyncpa [#allocation5], 1

</llo_original>
